<compile_context>
chip_gen: v5e
topology: v5e:2x2
jax: 0.10.0
libtpu: 0.0.40
codegen_flags: <defaults>
</compile_context>

<pallas_src>
import functools

import jax
import jax.numpy as jnp
from jax.experimental import pallas as pl
from jax.experimental.pallas import tpu as pltpu

_SUB = 8  # f32 sublane granularity for the batch (row) tile


def _cdiv(a: int, b: int) -> int:
    return -(-a // b)


def _round_up(x: int, m: int) -> int:
    return _cdiv(x, m) * m


def _pad2(x, shape):
    """Zero-pad a 2-D array up to `shape`."""
    r = shape[0] - x.shape[0]
    c = shape[1] - x.shape[1]
    if r == 0 and c == 0:
        return x
    return jnp.pad(x, ((0, r), (0, c)))


def _lane_multiple() -> int:
    """Feature-dim padding granularity: 256 on the 2x256^2 MXUs (v6e/v7x), else 128."""
    try:
        kind = jax.devices()[0].device_kind.lower()
    except Exception:
        return 128
    return 256 if ("v6" in kind or "v7" in kind) else 128


def _vmem_limit_bytes() -> int:
    """Generation-aware VMEM budget (v5e/v6e: 128 MiB physical, v7x: 64 MiB)."""
    try:
        cap = int(pltpu.get_tpu_info().vmem_capacity_bytes)
    except Exception:
        cap = 64 << 20  # conservative fallback
    return min(int(cap * 3 // 4), 96 << 20)


# ---------------------------------------------------------------------------
# Buffered(1) support probe (run once, eagerly, in prepare_params)
# ---------------------------------------------------------------------------
def _probe_copy_kernel(x_ref, o_ref):
    o_ref[...] = x_ref[...]


def _probe_single_buffer_ok() -> bool:
    """Check that pipeline_mode=pl.Buffered(1) compiles & runs on this jax/TPU."""
    try:
        fn = pl.pallas_call(
            _probe_copy_kernel,
            out_shape=jax.ShapeDtypeStruct((8, 128), jnp.float32),
            grid=(1,),
            in_specs=[pl.BlockSpec((8, 128), lambda i: (0, 0),
                                   pipeline_mode=pl.Buffered(1))],
            out_specs=pl.BlockSpec((8, 128), lambda i: (0, 0)),
        )
        jax.block_until_ready(fn(jnp.zeros((8, 128), jnp.float32)))
        return True
    except Exception:
        return False


_WEIGHT_BUFFERS = None  # set by prepare_params(); 1 = single-buffered resident weights


# ---------------------------------------------------------------------------
# One-time parameter preparation (pad + bf16 cast hoisted out of the call path)
# ---------------------------------------------------------------------------
def prepare_params(params, *, lane=None):
    """Pad feature dim to a lane-dense multiple and cast weights to bf16 (run once)."""
    global _WEIGHT_BUFFERS
    if _WEIGHT_BUFFERS is None:
        _WEIGHT_BUFFERS = 1 if _probe_single_buffer_ok() else 2

    lane = _lane_multiple() if lane is None else lane
    w1, b1 = params["w1"], params["b1"]
    w2, b2 = params["w2"], params["b2"]
    w3, b3 = params["w3"], params["b3"]
    E, D = w1.shape
    Dp = _round_up(D, lane)
    # TODO(synk): optional fp8 weight storage (+ per-channel scales) on v7x.
    w1p = _pad2(w1, (E, Dp)).astype(jnp.bfloat16)
    w2p = _pad2(w2, (Dp, Dp)).astype(jnp.bfloat16)
    w3p = _pad2(w3, (Dp, Dp)).astype(jnp.bfloat16)
    b1p = _pad2(b1, (1, Dp)).astype(jnp.float32)
    b2p = _pad2(b2, (1, Dp)).astype(jnp.float32)
    b3p = _pad2(b3, (1, Dp)).astype(jnp.float32)
    return (w1p, b1p, w2p, b2p, w3p, b3p)


# ---------------------------------------------------------------------------
# Fused kernel (weights fully VMEM-resident)
# ---------------------------------------------------------------------------
def _fused_mlp_kernel(z_ref, w1_ref, b1_ref, w2_ref, b2_ref, w3_ref, b3_ref, o_ref):
    # bf16 matmul operands on the MXU; f32 accumulate / bias-add / ReLU on the VPU.
    z = z_ref[...].astype(jnp.bfloat16)
    h = jnp.dot(z, w1_ref[...], preferred_element_type=jnp.float32) + b1_ref[...]
    h = jnp.maximum(h, 0.0)
    h = jnp.dot(h.astype(jnp.bfloat16), w2_ref[...],
                preferred_element_type=jnp.float32) + b2_ref[...]
    h = jnp.maximum(h, 0.0)
    h = jnp.dot(h.astype(jnp.bfloat16), w3_ref[...],
                preferred_element_type=jnp.float32) + b3_ref[...]
    o_ref[...] = h.astype(o_ref.dtype)


def _fused_call(zp, w1, b1, w2, b2, w3, b3, *, TB, out_dtype, vmem_limit, single_buffer):
    Bp, E = zp.shape
    Dp = w1.shape[1]
    nb = Bp // TB

    if single_buffer:
        def resident(shape):
            return pl.BlockSpec(shape, lambda i: (0, 0), pipeline_mode=pl.Buffered(1))
    else:
        def resident(shape):
            return pl.BlockSpec(shape, lambda i: (0, 0))

    flops = 2 * Bp * (E * Dp + 2 * Dp * Dp)
    bytes_accessed = (
        zp.size * zp.dtype.itemsize
        + Bp * Dp * jnp.dtype(out_dtype).itemsize
        + (w1.size + w2.size + w3.size) * 2
        + (b1.size + b2.size + b3.size) * 4
    )

    return pl.pallas_call(
        _fused_mlp_kernel,
        out_shape=jax.ShapeDtypeStruct((Bp, Dp), out_dtype),
        grid=(nb,),
        in_specs=[
            pl.BlockSpec((TB, E), lambda i: (i, 0)),   # z tile (pipelined)
            resident((E, Dp)), resident((1, Dp)),      # w1, b1 (VMEM-resident)
            resident((Dp, Dp)), resident((1, Dp)),     # w2, b2
            resident((Dp, Dp)), resident((1, Dp)),     # w3, b3
        ],
        out_specs=pl.BlockSpec((TB, Dp), lambda i: (i, 0)),
        compiler_params=pltpu.CompilerParams(
            dimension_semantics=("parallel",),
            vmem_limit_bytes=vmem_limit,
        ),
        cost_estimate=pl.CostEstimate(
            flops=flops, transcendentals=0, bytes_accessed=bytes_accessed),
    )(zp, w1, b1, w2, b2, w3, b3)


# ---------------------------------------------------------------------------
# Weight-tiled per-layer fallback (for D too large for resident weights)
# ---------------------------------------------------------------------------
def _linear_kernel(x_ref, w_ref, b_ref, o_ref, acc_ref, *, relu):
    @pl.when(pl.program_id(2) == 0)
    def _():
        acc_ref[...] = jnp.zeros_like(acc_ref)

    acc_ref[...] += jnp.dot(x_ref[...], w_ref[...],
                            preferred_element_type=jnp.float32)

    @pl.when(pl.program_id(2) == pl.num_programs(2) - 1)
    def _():
        h = acc_ref[...] + b_ref[...]
        if relu:
            h = jnp.maximum(h, 0.0)
        o_ref[...] = h.astype(o_ref.dtype)


def _pick_tile(total: int, target: int, step: int) -> int:
    t = max(step, (min(target, total) // step) * step)
    while total % t:
        t -= step
    return t


def _tiled_linear(x, w, b, *, relu, out_dtype, tb, vmem_limit, tn=512, tk=512):
    Bp, K = x.shape
    Np = w.shape[1]
    TN = _pick_tile(Np, tn, 128)
    TK = _pick_tile(K, tk, 128) if K % 128 == 0 else K  # small/odd K -> single K block
    grid = (Bp // tb, Np // TN, K // TK)
    kernel = functools.partial(_linear_kernel, relu=relu)
    return pl.pallas_call(
        kernel,
        out_shape=jax.ShapeDtypeStruct((Bp, Np), out_dtype),
        grid=grid,
        in_specs=[
            pl.BlockSpec((tb, TK), lambda i, j, k: (i, k)),
            pl.BlockSpec((TK, TN), lambda i, j, k: (k, j)),
            pl.BlockSpec((1, TN), lambda i, j, k: (0, j)),
        ],
        out_specs=pl.BlockSpec((tb, TN), lambda i, j, k: (i, j)),
        scratch_shapes=[pltpu.VMEM((tb, TN), jnp.float32)],
        compiler_params=pltpu.CompilerParams(
            dimension_semantics=("parallel", "parallel", "arbitrary"),
            vmem_limit_bytes=vmem_limit,
        ),
    )(x, w, b)


# ---------------------------------------------------------------------------
# Public forward
# ---------------------------------------------------------------------------
def _choose_batch_tile(B: int, batch_tile: int):
    # >= 2 grid steps when the batch allows it so both v7x TensorCores get work
    # (extra grid step costs ~0.35 us on single-TC chips - negligible), and pick
    # the tile to minimize batch padding (e.g. B=257 -> TB=136, not 256->512 pad).
    min_tiles = 2 if B >= 2 * _SUB else 1
    n_tiles = max(min_tiles, _cdiv(B, batch_tile))
    TB = _round_up(_cdiv(B, n_tiles), _SUB)
    Bp = _round_up(B, TB)
    return TB, Bp


@functools.partial(jax.jit,
                   static_argnames=("dim", "batch_tile", "out_dtype", "force_tiled"))
def scaling_module_forward(z, prepared, *, dim, batch_tile=256,
                           out_dtype=None, force_tiled=False):
    """Forward pass. z: [batch, embedding_dim] -> [batch, dim].

    `prepared` is the tuple returned by prepare_params(). `out_dtype=jnp.bfloat16`
    halves output HBM writeback (useful on store-limited v5e) when acceptable.
    """
    w1, b1, w2, b2, w3, b3 = prepared
    B, E = z.shape
    Dp = w1.shape[1]
    out_dtype = z.dtype if out_dtype is None else jnp.dtype(out_dtype)

    TB, Bp = _choose_batch_tile(B, batch_tile)
    # NOTE: E is used as a full-extent block dim; for very large non-128-multiple E,
    # pad E the same way D is padded to keep the MXU K dimension full.
    zp = _pad2(z, (Bp, E))

    vmem_limit = _vmem_limit_bytes()
    wbuf = _WEIGHT_BUFFERS if _WEIGHT_BUFFERS is not None else 2

    # Resident-weight VMEM estimate -> fused vs weight-tiled fallback.
    weight_bytes = (E * Dp + 2 * Dp * Dp) * 2 * wbuf + 3 * Dp * 4 * wbuf
    act_bytes = 2 * (TB * E * 4 + TB * Dp * jnp.dtype(out_dtype).itemsize)
    scratch_bytes = 3 * TB * Dp * 4  # f32 intermediates + bf16 copies (margin)
    use_fused = (not force_tiled) and (
        weight_bytes + act_bytes + scratch_bytes <= int(0.7 * vmem_limit))

    if use_fused:
        out = _fused_call(zp, w1, b1, w2, b2, w3, b3, TB=TB, out_dtype=out_dtype,
                          vmem_limit=vmem_limit, single_buffer=(wbuf == 1))
    else:
        # Per-layer tiled matmuls with K-reduction accumulator; bf16 intermediates
        # between layers to halve the extra HBM traffic of this path.
        h = _tiled_linear(zp.astype(jnp.bfloat16), w1, b1, relu=True,
                          out_dtype=jnp.bfloat16, tb=TB, vmem_limit=vmem_limit)
        h = _tiled_linear(h, w2, b2, relu=True,
                          out_dtype=jnp.bfloat16, tb=TB, vmem_limit=vmem_limit)
        out = _tiled_linear(h, w3, b3, relu=False,
                            out_dtype=out_dtype, tb=TB, vmem_limit=vmem_limit)

    return out[:B, :dim]


# ---------------------------------------------------------------------------
# Init + references + demo
# ---------------------------------------------------------------------------
def init_params(key, dim, embedding_dim, dtype=jnp.float32):
    """Mirrors nn.Linear default init (uniform +-1/sqrt(fan_in)); weights are [in, out]."""
    ks = jax.random.split(key, 6)

    def linear(kw, kb, fan_in, fan_out):
        bound = 1.0 / jnp.sqrt(float(fan_in))
        w = jax.random.uniform(kw, (fan_in, fan_out), dtype, -bound, bound)
        b = jax.random.uniform(kb, (1, fan_out), dtype, -bound, bound)
        return w, b

    w1, b1 = linear(ks[0], ks[1], embedding_dim, dim)
    w2, b2 = linear(ks[2], ks[3], dim, dim)
    w3, b3 = linear(ks[4], ks[5], dim, dim)
    return {"w1": w1, "b1": b1, "w2": w2, "b2": b2, "w3": w3, "b3": b3}


def _reference_forward_f32(z, p):
    h = jnp.maximum(z @ p["w1"] + p["b1"], 0.0)
    h = jnp.maximum(h @ p["w2"] + p["b2"], 0.0)
    return h @ p["w3"] + p["b3"]


def _reference_forward_bf16(z, p):
    """Mirror of the kernel's numerics: bf16 matmul operands, f32 accumulation."""
    bf = jnp.bfloat16
    h = jnp.dot(z.astype(bf), p["w1"].astype(bf),
                preferred_element_type=jnp.float32) + p["b1"]
    h = jnp.maximum(h, 0.0)
    h = jnp.dot(h.astype(bf), p["w2"].astype(bf),
                preferred_element_type=jnp.float32) + p["b2"]
    h = jnp.maximum(h, 0.0)
    return jnp.dot(h.astype(bf), p["w3"].astype(bf),
                   preferred_element_type=jnp.float32) + p["b3"]


if __name__ == "__main__":
    key = jax.random.PRNGKey(0)
    k_x, k_p = jax.random.split(key)

    batch = 8
    embedding_dim = 32
    dim = 64

    z = jax.random.normal(k_x, (batch, embedding_dim), dtype=jnp.float32)
    params = init_params(k_p, dim=dim, embedding_dim=embedding_dim)
    prepared = prepare_params(params)  # one-time pad + bf16 cast (hoisted out of fwd)

    # Fused (resident-weight) path.
    out = jax.block_until_ready(scaling_module_forward(z, prepared, dim=dim))
    assert out.shape == (batch, dim), out.shape

    ref_bf16 = _reference_forward_bf16(z, params)
    ref_f32 = _reference_forward_f32(z, params)
    assert jnp.allclose(out, ref_bf16, atol=5e-3, rtol=5e-3), "fused mismatch vs bf16 ref"
    assert jnp.allclose(out, ref_f32, atol=5e-2, rtol=5e-2), "fused mismatch vs f32 ref"

    # Exercise the weight-tiled fallback path (used automatically for very large D).
    out_tiled = jax.block_until_ready(
        scaling_module_forward(z, prepared, dim=dim, force_tiled=True))
    assert out_tiled.shape == (batch, dim), out_tiled.shape
    assert jnp.allclose(out_tiled, ref_bf16, atol=5e-3, rtol=5e-3), "tiled mismatch vs bf16 ref"
    assert jnp.allclose(out_tiled, ref_f32, atol=5e-2, rtol=5e-2), "tiled mismatch vs f32 ref"

    print("KERNEL_OK")
</pallas_src>

<mosaic_0001>
module attributes {stable_mosaic.version = 11 : i64} {
  func.func @_probe_copy_kernel(%arg0: i32, %arg1: memref<8x128xf32, #tpu.memory_space<vmem>>, %arg2: memref<8x128xf32, #tpu.memory_space<vmem>>) attributes {dimension_semantics = [#tpu.dimension_semantics<arbitrary>], iteration_bounds = array<i64: 1>, scalar_prefetch = 0 : i64, scratch_operands = 0 : i64, tpu.core_type = #tpu.core_type<tc>, window_params = [{pipeline_mode = #tpu.pipeline_mode<synchronous>, transform_indices = @transform_0, window_bounds = array<i64: 8, 128>}, {pipeline_mode = #tpu.pipeline_mode<synchronous>, transform_indices = @transform_1, window_bounds = array<i64: 8, 128>}]} {
    %c0 = arith.constant 0 : index
    %c0_0 = arith.constant 0 : index
    %0 = vector.load %arg1[%c0, %c0_0] : memref<8x128xf32, #tpu.memory_space<vmem>>, vector<8x128xf32>
    %c0_1 = arith.constant 0 : index
    %c0_2 = arith.constant 0 : index
    %1 = vector.load %arg2[%c0_1, %c0_2] : memref<8x128xf32, #tpu.memory_space<vmem>>, vector<8x128xf32>
    tpu.vector_store %arg2[%c0_1, %c0_2], %0 {strides = array<i32>} : memref<8x128xf32, #tpu.memory_space<vmem>>, vector<8x128xf32>,
    return
  }
  func.func @transform_0(%arg0: i32) -> (i32, i32) {
    %c0_i32 = arith.constant 0 : i32
    %c0_i32_0 = arith.constant 0 : i32
    %c0_i32_1 = arith.constant 0 : i32
    return %c0_i32, %c0_i32_0 : i32, i32
  }
  func.func @transform_1(%arg0: i32) -> (i32, i32) {
    %c0_i32 = arith.constant 0 : i32
    %c0_i32_0 = arith.constant 0 : i32
    %c0_i32_1 = arith.constant 0 : i32
    return %c0_i32, %c0_i32_0 : i32, i32
  }
}

module attributes {stable_mosaic.version = 11 : i64} {
  func.func @_fused_mlp_kernel(%arg0: i32, %arg1: memref<8x32xf32, #tpu.memory_space<vmem>>, %arg2: memref<32x128xbf16, #tpu.memory_space<vmem>>, %arg3: memref<1x128xf32, #tpu.memory_space<vmem>>, %arg4: memref<128x128xbf16, #tpu.memory_space<vmem>>, %arg5: memref<1x128xf32, #tpu.memory_space<vmem>>, %arg6: memref<128x128xbf16, #tpu.memory_space<vmem>>, %arg7: memref<1x128xf32, #tpu.memory_space<vmem>>, %arg8: memref<8x128xf32, #tpu.memory_space<vmem>>) attributes {dimension_semantics = [#tpu.dimension_semantics<parallel>], iteration_bounds = array<i64: 1>, scalar_prefetch = 0 : i64, scratch_operands = 0 : i64, tpu.core_type = #tpu.core_type<tc>, window_params = [{transform_indices = @transform_0, window_bounds = array<i64: 8, 32>}, {pipeline_mode = #tpu.pipeline_mode<synchronous>, transform_indices = @transform_1, window_bounds = array<i64: 32, 128>}, {pipeline_mode = #tpu.pipeline_mode<synchronous>, transform_indices = @transform_2, window_bounds = array<i64: 1, 128>}, {pipeline_mode = #tpu.pipeline_mode<synchronous>, transform_indices = @transform_3, window_bounds = array<i64: 128, 128>}, {pipeline_mode = #tpu.pipeline_mode<synchronous>, transform_indices = @transform_4, window_bounds = array<i64: 1, 128>}, {pipeline_mode = #tpu.pipeline_mode<synchronous>, transform_indices = @transform_5, window_bounds = array<i64: 128, 128>}, {pipeline_mode = #tpu.pipeline_mode<synchronous>, transform_indices = @transform_6, window_bounds = array<i64: 1, 128>}, {transform_indices = @transform_7, window_bounds = array<i64: 8, 128>}]} {
    %c0 = arith.constant 0 : index
    %c0_0 = arith.constant 0 : index
    %0 = vector.load %arg1[%c0, %c0_0] : memref<8x32xf32, #tpu.memory_space<vmem>>, vector<8x32xf32>
    %1 = arith.truncf %0 : vector<8x32xf32> to vector<8x32xbf16>
    %c0_1 = arith.constant 0 : index
    %c0_2 = arith.constant 0 : index
    %2 = vector.load %arg2[%c0_1, %c0_2] : memref<32x128xbf16, #tpu.memory_space<vmem>>, vector<32x128xbf16>
    %cst = arith.constant dense<0.000000e+00> : vector<8x128xf32>
    %3 = tpu.matmul %1, %2, %cst {dimension_numbers = #tpu.dot_dimension_numbers<[1], [0], [0], [1], [0, 0, 1, 1], [], []>} : vector<8x32xbf16>, vector<32x128xbf16>, vector<8x128xf32> -> vector<8x128xf32>
    %c0_3 = arith.constant 0 : index
    %c0_4 = arith.constant 0 : index
    %4 = vector.load %arg3[%c0_3, %c0_4] : memref<1x128xf32, #tpu.memory_space<vmem>>, vector<1x128xf32>
    %5 = vector.broadcast %4 : vector<1x128xf32> to vector<8x128xf32>
    %6 = arith.addf %3, %5 : vector<8x128xf32>
    %cst_5 = arith.constant 0.000000e+00 : f32
    %7 = vector.broadcast %cst_5 : f32 to vector<8x128xf32>
    %8 = arith.maximumf %6, %7 : vector<8x128xf32>
    %9 = arith.truncf %8 : vector<8x128xf32> to vector<8x128xbf16>
    %c0_6 = arith.constant 0 : index
    %c0_7 = arith.constant 0 : index
    %10 = vector.load %arg4[%c0_6, %c0_7] : memref<128x128xbf16, #tpu.memory_space<vmem>>, vector<128x128xbf16>
    %cst_8 = arith.constant dense<0.000000e+00> : vector<8x128xf32>
    %11 = tpu.matmul %9, %10, %cst_8 {dimension_numbers = #tpu.dot_dimension_numbers<[1], [0], [0], [1], [0, 0, 1, 1], [], []>} : vector<8x128xbf16>, vector<128x128xbf16>, vector<8x128xf32> -> vector<8x128xf32>
    %c0_9 = arith.constant 0 : index
    %c0_10 = arith.constant 0 : index
    %12 = vector.load %arg5[%c0_9, %c0_10] : memref<1x128xf32, #tpu.memory_space<vmem>>, vector<1x128xf32>
    %13 = vector.broadcast %12 : vector<1x128xf32> to vector<8x128xf32>
    %14 = arith.addf %11, %13 : vector<8x128xf32>
    %cst_11 = arith.constant 0.000000e+00 : f32
    %15 = vector.broadcast %cst_11 : f32 to vector<8x128xf32>
    %16 = arith.maximumf %14, %15 : vector<8x128xf32>
    %17 = arith.truncf %16 : vector<8x128xf32> to vector<8x128xbf16>
    %c0_12 = arith.constant 0 : index
    %c0_13 = arith.constant 0 : index
    %18 = vector.load %arg6[%c0_12, %c0_13] : memref<128x128xbf16, #tpu.memory_space<vmem>>, vector<128x128xbf16>
    %cst_14 = arith.constant dense<0.000000e+00> : vector<8x128xf32>
    %19 = tpu.matmul %17, %18, %cst_14 {dimension_numbers = #tpu.dot_dimension_numbers<[1], [0], [0], [1], [0, 0, 1, 1], [], []>} : vector<8x128xbf16>, vector<128x128xbf16>, vector<8x128xf32> -> vector<8x128xf32>
    %c0_15 = arith.constant 0 : index
    %c0_16 = arith.constant 0 : index
    %20 = vector.load %arg7[%c0_15, %c0_16] : memref<1x128xf32, #tpu.memory_space<vmem>>, vector<1x128xf32>
    %21 = vector.broadcast %20 : vector<1x128xf32> to vector<8x128xf32>
    %22 = arith.addf %19, %21 : vector<8x128xf32>
    %c0_17 = arith.constant 0 : index
    %c0_18 = arith.constant 0 : index
    %23 = vector.load %arg8[%c0_17, %c0_18] : memref<8x128xf32, #tpu.memory_space<vmem>>, vector<8x128xf32>
    tpu.vector_store %arg8[%c0_17, %c0_18], %22 {strides = array<i32>} : memref<8x128xf32, #tpu.memory_space<vmem>>, vector<8x128xf32>,
    return
  }
  func.func @transform_0(%arg0: i32) -> (i32, i32) {
    %c0_i32 = arith.constant 0 : i32
    %c0_i32_0 = arith.constant 0 : i32
    return %arg0, %c0_i32 : i32, i32
  }
  func.func @transform_1(%arg0: i32) -> (i32, i32) {
    %c0_i32 = arith.constant 0 : i32
    %c0_i32_0 = arith.constant 0 : i32
    %c0_i32_1 = arith.constant 0 : i32
    return %c0_i32, %c0_i32_0 : i32, i32
  }
  func.func @transform_2(%arg0: i32) -> (i32, i32) {
    %c0_i32 = arith.constant 0 : i32
    %c0_i32_0 = arith.constant 0 : i32
    %c0_i32_1 = arith.constant 0 : i32
    return %c0_i32, %c0_i32_0 : i32, i32
  }
  func.func @transform_3(%arg0: i32) -> (i32, i32) {
    %c0_i32 = arith.constant 0 : i32
    %c0_i32_0 = arith.constant 0 : i32
    %c0_i32_1 = arith.constant 0 : i32
    return %c0_i32, %c0_i32_0 : i32, i32
  }
  func.func @transform_4(%arg0: i32) -> (i32, i32) {
    %c0_i32 = arith.constant 0 : i32
    %c0_i32_0 = arith.constant 0 : i32
    %c0_i32_1 = arith.constant 0 : i32
    return %c0_i32, %c0_i32_0 : i32, i32
  }
  func.func @transform_5(%arg0: i32) -> (i32, i32) {
    %c0_i32 = arith.constant 0 : i32
    %c0_i32_0 = arith.constant 0 : i32
    %c0_i32_1 = arith.constant 0 : i32
    return %c0_i32, %c0_i32_0 : i32, i32
  }
  func.func @transform_6(%arg0: i32) -> (i32, i32) {
    %c0_i32 = arith.constant 0 : i32
    %c0_i32_0 = arith.constant 0 : i32
    %c0_i32_1 = arith.constant 0 : i32
    return %c0_i32, %c0_i32_0 : i32, i32
  }
  func.func @transform_7(%arg0: i32) -> (i32, i32) {
    %c0_i32 = arith.constant 0 : i32
    %c0_i32_0 = arith.constant 0 : i32
    return %arg0, %c0_i32 : i32, i32
  }
}

</mosaic_0001>

<llo_original>
// kernel: tpu_custom_call.1
$region0: #{tpu_custom_call.1}
  #allocation0 [shape = 'u32[]', space=smem, size = 0x4, offset = 0x4, fixed_abs, tag = 'smem constant byte address 0x4 - core index']
  #allocation1 [shape = 'u32[72,128]{1,0:T(1,128)}', space=vmem, size = 0x9000, scoped, tag = 'internal scratch']
  %s0 = inlined_call_operand.hbm [shape: f32[8,128], index: 0, kind: input, shape index: {}]
  %s1 = inlined_call_operand.hbm [shape: f32[8,128], index: 1, kind: output, shape index: {}]
  %s2 = sld [smem:[#allocation0]]
  $region18: #{tpu_custom_call.1} parent=0
    _
  %s4 = ssub.s32 1, %s2
  %s5 = scalar_select 0, %s4, %s2
  $region1: #{tpu_custom_call.1} parent=0
    #allocation2 [shape = 'u8[4096]{0}', space=vmem, size = 0x1000, scoped, tag = 'input window, operand 0, single buffered']
    #allocation3 [shape = 's32[1]{0}', space=sflag, size = 0x4, scoped, tag = 'scoped memory for tpu_custom_call.1']
    #allocation4 [shape = 's32[1]{0}', space=sflag, size = 0x4, scoped, tag = 'scoped memory for tpu_custom_call.1']
    #allocation5 [shape = 'u8[4096]{0}', space=vmem, size = 0x1000, scoped, tag = 'output window, operand 0, single buffered']
    %6 = vsyncpa [#allocation3], 0
    %7 = vsyncpa [#allocation4], 0
    // Predicated region
    $region2: #{tpu_custom_call.1} parent=1 // pred_check
      _
    $region3: #{tpu_custom_call.1} parent=1 // pred_check_branch
      %9 = sbr.rel (0) target = $region5
    $region4: #{tpu_custom_call.1} parent=1 // pred_region
      %11 = vsyncadd [#allocation3], 0
      %s13 = sshll.u32 %s0, 4
      %s14 = int_to_ptr.hbm [resolvable:$true] %s13
      %s15 = sshll.u32 [#allocation2], 4
      %s16 = int_to_ptr.vmem [resolvable:$true] %s15
      %18 = dma.hbm_to_vmem [thread:$0]  %s14, 128, %s16, [#allocation3]
    $region5: #{tpu_custom_call.1} parent=1 // pred_fallthru
      _
    // Predicated region
    $region6: #{tpu_custom_call.1} parent=1 // pred_check
      _
    $region7: #{tpu_custom_call.1} parent=1 // pred_check_branch
      %20 = sbr.rel (0) target = $region9
    $region8: #{tpu_custom_call.1} parent=1 // pred_region
      %22 = dma.done [#allocation3], 128
    $region9: #{tpu_custom_call.1} parent=1 // pred_fallthru
      _
    %v23 = vld [vmem:[#allocation2] sm:$0xff]
    %24 = vst [vmem:[#allocation5] sm:$0xff] %v23
    // Predicated region
    $region10: #{tpu_custom_call.1} parent=1 // pred_check
      _
    $region11: #{tpu_custom_call.1} parent=1 // pred_check_branch
      %26 = sbr.rel (0) target = $region13
    $region12: #{tpu_custom_call.1} parent=1 // pred_region
      %28 = vsyncadd [#allocation4], 0
      %s30 = sshll.u32 [#allocation5], 4
      %s31 = int_to_ptr.vmem [resolvable:$true] %s30
      %s32 = sshll.u32 %s1, 4
      %s33 = int_to_ptr.hbm [resolvable:$true] %s32
      %35 = dma.vmem_to_hbm [thread:$0]  %s31, 128, %s33, [#allocation4]
    $region13: #{tpu_custom_call.1} parent=1 // pred_fallthru
      _
    // Predicated region
    $region14: #{tpu_custom_call.1} parent=1 // pred_check
      _
    $region15: #{tpu_custom_call.1} parent=1 // pred_check_branch
      %37 = sbr.rel (0) target = $region17
    $region16: #{tpu_custom_call.1} parent=1 // pred_region
      %39 = dma.done [#allocation4], 128
    $region17: #{tpu_custom_call.1} parent=1 // pred_fallthru
      _
    %40 = vsyncpa [#allocation3], 1
    %41 = vsyncpa [#allocation4], 1

// kernel: scaling_module_forward.1
$region0: #{scaling_module_forward.1}
  #allocation0 [shape = 'u32[]', space=smem, size = 0x4, offset = 0x4, fixed_abs, tag = 'smem constant byte address 0x4 - core index']
  #allocation1 [shape = 'u32[72,128]{1,0:T(1,128)}', space=vmem, size = 0x9000, scoped, tag = 'internal scratch']
  %s0 = inlined_call_operand.hbm [shape: f32[8,32], index: 0, kind: input, shape index: {}]
  %s1 = inlined_call_operand.hbm [shape: bf16[32,128], index: 1, kind: input, shape index: {}]
  %s2 = inlined_call_operand.vmem [shape: f32[1,128], index: 2, kind: input, shape index: {}]
  %s3 = inlined_call_operand.hbm [shape: bf16[128,128], index: 3, kind: input, shape index: {}]
  %s4 = inlined_call_operand.vmem [shape: f32[1,128], index: 4, kind: input, shape index: {}]
  %s5 = inlined_call_operand.hbm [shape: bf16[128,128], index: 5, kind: input, shape index: {}]
  %s6 = inlined_call_operand.vmem [shape: f32[1,128], index: 6, kind: input, shape index: {}]
  %s7 = inlined_call_operand.hbm [shape: f32[8,128], index: 7, kind: output, shape index: {}]
  %s8 = sld [smem:[#allocation0]]
  $region54: #{scaling_module_forward.1} parent=0
    _
  %s10 = ssub.s32 1, %s8
  %s11 = scalar_select 0, %s10, %s8
  $region1: #{scaling_module_forward.1} parent=0
    #allocation2 [shape = 'u8[4096]{0}', space=vmem, size = 0x1000, scoped, tag = 'input window, operand 0, single buffered']
    #allocation3 [shape = 's32[1]{0}', space=sflag, size = 0x4, scoped, tag = 'scoped memory for scaling_module_forward.1']
    #allocation4 [shape = 's32[1]{0}', space=sflag, size = 0x4, scoped, tag = 'scoped memory for scaling_module_forward.1']
    #allocation5 [shape = 'u8[8192]{0}', space=vmem, size = 0x2000, scoped, tag = 'input window, operand 1, single buffered']
    #allocation6 [shape = 's32[1]{0}', space=sflag, size = 0x4, scoped, tag = 'scoped memory for scaling_module_forward.1']
    #allocation7 [shape = 'u8[32768]{0}', space=vmem, size = 0x8000, scoped, tag = 'input window, operand 3, single buffered']
    #allocation8 [shape = 'u8[32768]{0}', space=vmem, size = 0x8000, scoped, tag = 'input window, operand 5, single buffered']
    #allocation9 [shape = 's32[1]{0}', space=sflag, size = 0x4, scoped, tag = 'scoped memory for scaling_module_forward.1']
    #allocation10 [shape = 'u8[4096]{0}', space=vmem, size = 0x1000, scoped, tag = 'output window, operand 0, single buffered']
    %12 = vsyncpa [#allocation3], 0
    %13 = vsyncpa [#allocation6], 0
    %14 = vsyncpa [#allocation9], 0
    %15 = vsyncpa [#allocation4], 0
    // Predicated region
    $region2: #{scaling_module_forward.1} parent=1 // pred_check
      _
    $region3: #{scaling_module_forward.1} parent=1 // pred_check_branch
      %17 = sbr.rel (0) target = $region5
    $region4: #{scaling_module_forward.1} parent=1 // pred_region
      %19 = vsyncadd [#allocation3], 0
      %s21 = sshll.u32 %s0, 4
      %s22 = int_to_ptr.hbm [resolvable:$true] %s21
      %s23 = sshll.u32 [#allocation2], 4
      %s24 = int_to_ptr.vmem [resolvable:$true] %s23
      %26 = dma.hbm_to_vmem [thread:$0]  %s22, 128, %s24, [#allocation3]
    $region5: #{scaling_module_forward.1} parent=1 // pred_fallthru
      _
    // Predicated region
    $region6: #{scaling_module_forward.1} parent=1 // pred_check
      _
    $region7: #{scaling_module_forward.1} parent=1 // pred_check_branch
      %28 = sbr.rel (0) target = $region9
    $region8: #{scaling_module_forward.1} parent=1 // pred_region
      %30 = vsyncadd [#allocation6], 0
      %s31 = sshll.u32 %s1, 4
      %s32 = int_to_ptr.hbm [resolvable:$true] %s31
      %s33 = sshll.u32 [#allocation5], 4
      %s34 = int_to_ptr.vmem [resolvable:$true] %s33
      %39 = dma.hbm_to_vmem [thread:$0]  %s32, 256, %s34, [#allocation6], 64, 64, 4
    $region9: #{scaling_module_forward.1} parent=1 // pred_fallthru
      _
    // Predicated region
    $region10: #{scaling_module_forward.1} parent=1 // pred_check
      _
    $region11: #{scaling_module_forward.1} parent=1 // pred_check_branch
      %41 = sbr.rel (0) target = $region13
    $region12: #{scaling_module_forward.1} parent=1 // pred_region
      _
    $region13: #{scaling_module_forward.1} parent=1 // pred_fallthru
      _
    // Predicated region
    $region14: #{scaling_module_forward.1} parent=1 // pred_check
      _
    $region15: #{scaling_module_forward.1} parent=1 // pred_check_branch
      %43 = sbr.rel (0) target = $region17
    $region16: #{scaling_module_forward.1} parent=1 // pred_region
      %45 = vsyncadd [#allocation6], 0
      %s46 = sshll.u32 %s3, 4
      %s47 = int_to_ptr.hbm [resolvable:$true] %s46
      %s48 = sshll.u32 [#allocation7], 4
      %s49 = int_to_ptr.vmem [resolvable:$true] %s48
      %54 = dma.hbm_to_vmem [thread:$0]  %s47, 1024, %s49, [#allocation6], 64, 64, 4
    $region17: #{scaling_module_forward.1} parent=1 // pred_fallthru
      _
    // Predicated region
    $region18: #{scaling_module_forward.1} parent=1 // pred_check
      _
    $region19: #{scaling_module_forward.1} parent=1 // pred_check_branch
      %56 = sbr.rel (0) target = $region21
    $region20: #{scaling_module_forward.1} parent=1 // pred_region
      _
    $region21: #{scaling_module_forward.1} parent=1 // pred_fallthru
      _
    // Predicated region
    $region22: #{scaling_module_forward.1} parent=1 // pred_check
      _
    $region23: #{scaling_module_forward.1} parent=1 // pred_check_branch
      %58 = sbr.rel (0) target = $region25
    $region24: #{scaling_module_forward.1} parent=1 // pred_region
      %60 = vsyncadd [#allocation9], 0
      %s61 = sshll.u32 %s5, 4
      %s62 = int_to_ptr.hbm [resolvable:$true] %s61
      %s63 = sshll.u32 [#allocation8], 4
      %s64 = int_to_ptr.vmem [resolvable:$true] %s63
      %69 = dma.hbm_to_vmem [thread:$0]  %s62, 1024, %s64, [#allocation9], 64, 64, 4
    $region25: #{scaling_module_forward.1} parent=1 // pred_fallthru
      _
    // Predicated region
    $region26: #{scaling_module_forward.1} parent=1 // pred_check
      _
    $region27: #{scaling_module_forward.1} parent=1 // pred_check_branch
      %71 = sbr.rel (0) target = $region29
    $region28: #{scaling_module_forward.1} parent=1 // pred_region
      _
    $region29: #{scaling_module_forward.1} parent=1 // pred_fallthru
      _
    // Predicated region
    $region30: #{scaling_module_forward.1} parent=1 // pred_check
      _
    $region31: #{scaling_module_forward.1} parent=1 // pred_check_branch
      %73 = sbr.rel (0) target = $region33
    $region32: #{scaling_module_forward.1} parent=1 // pred_region
      %75 = dma.done [#allocation3], 128
    $region33: #{scaling_module_forward.1} parent=1 // pred_fallthru
      _
    // Predicated region
    $region34: #{scaling_module_forward.1} parent=1 // pred_check
      _
    $region35: #{scaling_module_forward.1} parent=1 // pred_check_branch
      %77 = sbr.rel (0) target = $region37
    $region36: #{scaling_module_forward.1} parent=1 // pred_region
      %79 = dma.done [#allocation6], 256
    $region37: #{scaling_module_forward.1} parent=1 // pred_fallthru
      _
    // Predicated region
    $region38: #{scaling_module_forward.1} parent=1 // pred_check
      _
    $region39: #{scaling_module_forward.1} parent=1 // pred_check_branch
      %81 = sbr.rel (0) target = $region41
    $region40: #{scaling_module_forward.1} parent=1 // pred_region
      %83 = dma.done [#allocation6], 1024
    $region41: #{scaling_module_forward.1} parent=1 // pred_fallthru
      _
    // Predicated region
    $region42: #{scaling_module_forward.1} parent=1 // pred_check
      _
    $region43: #{scaling_module_forward.1} parent=1 // pred_check_branch
      %85 = sbr.rel (0) target = $region45
    $region44: #{scaling_module_forward.1} parent=1 // pred_region
      %87 = dma.done [#allocation9], 1024
    $region45: #{scaling_module_forward.1} parent=1 // pred_fallthru
      _
    %v89 = vld [vmem:[#allocation2] sm:$0xff]
    %v90 = vpack.c.bf16 %v89, %v89
    %v91 = vld [vmem:[#allocation5] sm:$0xf]
    %v92 = vld [vmem:[#allocation5 + $0x4] sm:$0xf]
    %v93 = vld [vmem:[#allocation5 + $0x8] sm:$0xf]
    %v94 = vld [vmem:[#allocation5 + $0xc] sm:$0xf]
    %v95 = vld [vmem:[%s2] sm:$0x1]
    %v97 = vperm.slane %v95, 0
    %v103 = vunpack.c.l.b16 %v91
    %v104 = vunpack.c.l.b16 %v92
    %v105 = vunpack.c.l.b16 %v93
    %v106 = vunpack.c.l.b16 %v94
    %v107 = vpack.c.b16 %v104, %v103
    %v108 = vpack.c.b16 %v106, %v105
    %vm111 = vcmask 261120
    %v113 = vsel %vm111, %v90, 0
    %115 = vmatpush.bf16.msra.mxu0 0
    %116 = vmatpush.bf16.msra.mxu0 0
    %117 = vmatpush.bf16.msra.mxu0 0
    %118 = vmatpush.bf16.msra.mxu0 0
    %119 = vmatpush.bf16.msra.mxu0 0
    %120 = vmatpush.bf16.msra.mxu0 0
    %121 = vmatpush.bf16.msra.mxu0 %v108
    %122 = vmatpush.bf16.msra.mxu0 %v107
    %123 = vmatmul.bf16.gmra.mxu0 %v113
    %v124 = vpop.f32.mrf.mxu0
    %v125 = vadd.f32 %v97, %v124
    %v126 = vpop.f32.mrf.mxu0
    %127 = vdwg.mxu0
    %v128 = vmax.f32 %v125, 0.0
    %v129 = vpack.c.bf16 %v128, %v128
    %v130 = vld [vmem:[#allocation7] sm:$0xf]
    %v131 = vld [vmem:[#allocation7 + $0x4] sm:$0xf]
    %v132 = vld [vmem:[#allocation7 + $0x8] sm:$0xf]
    %v133 = vld [vmem:[#allocation7 + $0xc] sm:$0xf]
    %v134 = vld [vmem:[#allocation7 + $0x10] sm:$0xf]
    %v135 = vld [vmem:[#allocation7 + $0x14] sm:$0xf]
    %v136 = vld [vmem:[#allocation7 + $0x18] sm:$0xf]
    %v137 = vld [vmem:[#allocation7 + $0x1c] sm:$0xf]
    %v138 = vld [vmem:[#allocation7 + $0x20] sm:$0xf]
    %v139 = vld [vmem:[#allocation7 + $0x24] sm:$0xf]
    %v140 = vld [vmem:[#allocation7 + $0x28] sm:$0xf]
    %v141 = vld [vmem:[#allocation7 + $0x2c] sm:$0xf]
    %v142 = vld [vmem:[#allocation7 + $0x30] sm:$0xf]
    %v143 = vld [vmem:[#allocation7 + $0x34] sm:$0xf]
    %v144 = vld [vmem:[#allocation7 + $0x38] sm:$0xf]
    %v145 = vld [vmem:[#allocation7 + $0x3c] sm:$0xf]
    %v146 = vld [vmem:[%s4] sm:$0x1]
    %v148 = vperm.slane %v146, 0
    %v166 = vunpack.c.l.b16 %v130
    %v167 = vunpack.c.l.b16 %v131
    %v168 = vunpack.c.l.b16 %v132
    %v169 = vunpack.c.l.b16 %v133
    %v170 = vunpack.c.l.b16 %v134
    %v171 = vunpack.c.l.b16 %v135
    %v172 = vunpack.c.l.b16 %v136
    %v173 = vunpack.c.l.b16 %v137
    %v174 = vunpack.c.l.b16 %v138
    %v175 = vunpack.c.l.b16 %v139
    %v176 = vunpack.c.l.b16 %v140
    %v177 = vunpack.c.l.b16 %v141
    %v178 = vunpack.c.l.b16 %v142
    %v179 = vunpack.c.l.b16 %v143
    %v180 = vunpack.c.l.b16 %v144
    %v181 = vunpack.c.l.b16 %v145
    %v182 = vpack.c.b16 %v167, %v166
    %v183 = vpack.c.b16 %v169, %v168
    %v184 = vpack.c.b16 %v171, %v170
    %v185 = vpack.c.b16 %v173, %v172
    %v186 = vpack.c.b16 %v175, %v174
    %v187 = vpack.c.b16 %v177, %v176
    %v188 = vpack.c.b16 %v179, %v178
    %v189 = vpack.c.b16 %v181, %v180
    %198 = vmatpush.bf16.msra.mxu0 %v189
    %199 = vmatpush.bf16.msra.mxu0 %v188
    %200 = vmatpush.bf16.msra.mxu0 %v187
    %201 = vmatpush.bf16.msra.mxu0 %v186
    %202 = vmatpush.bf16.msra.mxu0 %v185
    %203 = vmatpush.bf16.msra.mxu0 %v184
    %204 = vmatpush.bf16.msra.mxu0 %v183
    %205 = vmatpush.bf16.msra.mxu0 %v182
    %206 = vmatmul.bf16.gmra.mxu0 %v129
    %v207 = vpop.f32.mrf.mxu0
    %v208 = vadd.f32 %v148, %v207
    %v209 = vpop.f32.mrf.mxu0
    %210 = vdwg.mxu0
    %v211 = vmax.f32 %v208, 0.0
    %v212 = vpack.c.bf16 %v211, %v211
    %v213 = vld [vmem:[#allocation8] sm:$0xf]
    %v214 = vld [vmem:[#allocation8 + $0x4] sm:$0xf]
    %v215 = vld [vmem:[#allocation8 + $0x8] sm:$0xf]
    %v216 = vld [vmem:[#allocation8 + $0xc] sm:$0xf]
    %v217 = vld [vmem:[#allocation8 + $0x10] sm:$0xf]
    %v218 = vld [vmem:[#allocation8 + $0x14] sm:$0xf]
    %v219 = vld [vmem:[#allocation8 + $0x18] sm:$0xf]
    %v220 = vld [vmem:[#allocation8 + $0x1c] sm:$0xf]
    %v221 = vld [vmem:[#allocation8 + $0x20] sm:$0xf]
    %v222 = vld [vmem:[#allocation8 + $0x24] sm:$0xf]
    %v223 = vld [vmem:[#allocation8 + $0x28] sm:$0xf]
    %v224 = vld [vmem:[#allocation8 + $0x2c] sm:$0xf]
    %v225 = vld [vmem:[#allocation8 + $0x30] sm:$0xf]
    %v226 = vld [vmem:[#allocation8 + $0x34] sm:$0xf]
    %v227 = vld [vmem:[#allocation8 + $0x38] sm:$0xf]
    %v228 = vld [vmem:[#allocation8 + $0x3c] sm:$0xf]
    %v229 = vld [vmem:[%s6] sm:$0x1]
    %v231 = vperm.slane %v229, 0
    %v249 = vunpack.c.l.b16 %v213
    %v250 = vunpack.c.l.b16 %v214
    %v251 = vunpack.c.l.b16 %v215
    %v252 = vunpack.c.l.b16 %v216
    %v253 = vunpack.c.l.b16 %v217
    %v254 = vunpack.c.l.b16 %v218
    %v255 = vunpack.c.l.b16 %v219
    %v256 = vunpack.c.l.b16 %v220
    %v257 = vunpack.c.l.b16 %v221
    %v258 = vunpack.c.l.b16 %v222
    %v259 = vunpack.c.l.b16 %v223
    %v260 = vunpack.c.l.b16 %v224
    %v261 = vunpack.c.l.b16 %v225
    %v262 = vunpack.c.l.b16 %v226
    %v263 = vunpack.c.l.b16 %v227
    %v264 = vunpack.c.l.b16 %v228
    %v265 = vpack.c.b16 %v250, %v249
    %v266 = vpack.c.b16 %v252, %v251
    %v267 = vpack.c.b16 %v254, %v253
    %v268 = vpack.c.b16 %v256, %v255
    %v269 = vpack.c.b16 %v258, %v257
    %v270 = vpack.c.b16 %v260, %v259
    %v271 = vpack.c.b16 %v262, %v261
    %v272 = vpack.c.b16 %v264, %v263
    %281 = vmatpush.bf16.msra.mxu0 %v272
    %282 = vmatpush.bf16.msra.mxu0 %v271
    %283 = vmatpush.bf16.msra.mxu0 %v270
    %284 = vmatpush.bf16.msra.mxu0 %v269
    %285 = vmatpush.bf16.msra.mxu0 %v268
    %286 = vmatpush.bf16.msra.mxu0 %v267
    %287 = vmatpush.bf16.msra.mxu0 %v266
    %288 = vmatpush.bf16.msra.mxu0 %v265
    %289 = vmatmul.bf16.gmra.mxu0 %v212
    %v290 = vpop.f32.mrf.mxu0
    %v291 = vadd.f32 %v231, %v290
    %v292 = vpop.f32.mrf.mxu0
    %293 = vdwg.mxu0
    %294 = vst [vmem:[#allocation10] sm:$0xff] %v291
    // Predicated region
    $region46: #{scaling_module_forward.1} parent=1 // pred_check
      _
    $region47: #{scaling_module_forward.1} parent=1 // pred_check_branch
      %296 = sbr.rel (0) target = $region49
    $region48: #{scaling_module_forward.1} parent=1 // pred_region
      %298 = vsyncadd [#allocation4], 0
      %s300 = sshll.u32 [#allocation10], 4
      %s301 = int_to_ptr.vmem [resolvable:$true] %s300
      %s302 = sshll.u32 %s7, 4
      %s303 = int_to_ptr.hbm [resolvable:$true] %s302
      %305 = dma.vmem_to_hbm [thread:$0]  %s301, 128, %s303, [#allocation4]
    $region49: #{scaling_module_forward.1} parent=1 // pred_fallthru
      _
    // Predicated region
    $region50: #{scaling_module_forward.1} parent=1 // pred_check
      _
    $region51: #{scaling_module_forward.1} parent=1 // pred_check_branch
      %307 = sbr.rel (0) target = $region53
    $region52: #{scaling_module_forward.1} parent=1 // pred_region
      %309 = dma.done [#allocation4], 128
    $region53: #{scaling_module_forward.1} parent=1 // pred_fallthru
      _
    %310 = vsyncpa [#allocation3], 1
    %311 = vsyncpa [#allocation6], 1
    %312 = vsyncpa [#allocation9], 1
    %313 = vsyncpa [#allocation4], 1

</llo_original>
